<compile_context>
chip_gen: v6e
topology: v6e:2x2x1
jax: 0.10.0
libtpu: 0.0.40
codegen_flags: <defaults>
</compile_context>

<pallas_src>
import functools

import jax
import jax.numpy as jnp
from jax.experimental import pallas as pl
from jax.experimental.pallas import tpu as pltpu


def _round_up(x, m):
    return ((x + m - 1) // m) * m


def _make_kernel(num_classes, bbox_out):
    def kernel(x_ref, w_ref, b_ref, out_ref):
        # x_ref: (TILE_N, dim_in)   w_ref: (dim_in, OUT_PAD)   b_ref: (1, OUT_PAD)
        # out_ref: (TILE_N, OUT_PAD)  with OUT_PAD a multiple of 128.
        fused = jnp.dot(x_ref[...], w_ref[...],
                        preferred_element_type=jnp.float32) + b_ref[...]

        lane = jax.lax.broadcasted_iota(jnp.int32, fused.shape, dimension=1)
        cls_mask = lane < num_classes
        bbox_mask = jnp.logical_and(lane >= num_classes,
                                    lane < num_classes + bbox_out)

        # Numerically-stable softmax over the real class lanes only.
        # All math is strictly row-independent (required: the final grid block
        # may carry undefined rows that the wrapper slices away).
        logits = jnp.where(cls_mask, fused, -jnp.inf)
        m = jnp.max(logits, axis=1, keepdims=True)
        e = jnp.exp(logits - m)                      # exp(-inf) == 0 off-class
        denom = jnp.sum(e, axis=1, keepdims=True)
        probs = e * pl.reciprocal(denom, approx=False)   # exact; hidden by DMA

        # Lane-dense slab: probs in cls lanes, raw preds in bbox lanes, 0 pad.
        out = probs + jnp.where(bbox_mask, fused, 0.0)
        out_ref[...] = out.astype(out_ref.dtype)

    return kernel


def fuse_params(w_cls, b_cls, w_bbox, b_bbox, dtype=jnp.float32):
    """One-time fusion + lane-padding of the two Linear layers (hoisted out of
    the per-call path).  Weights arrive in PyTorch (out, in) layout.

    The contraction dim is kept at dim_in (NOT padded to 128) so the activation
    x never needs a wrapper-side pad/copy in HBM.
    """
    num_classes, dim_in = w_cls.shape
    bbox_out = w_bbox.shape[0]
    out_pad = _round_up(num_classes + bbox_out, 128)

    w = jnp.zeros((dim_in, out_pad), dtype)
    w = w.at[:, :num_classes].set(w_cls.T.astype(dtype))
    w = w.at[:, num_classes:num_classes + bbox_out].set(w_bbox.T.astype(dtype))
    b = jnp.zeros((1, out_pad), jnp.float32)             # bias adds into f32 acc
    b = b.at[0, :num_classes].set(b_cls.astype(jnp.float32))
    b = b.at[0, num_classes:num_classes + bbox_out].set(
        b_bbox.astype(jnp.float32))
    return w, b


def fast_rcnn_outputs_forward(x, w_fused, b_fused, *, num_classes, bbox_out,
                              tile_n=1024, return_slab=False):
    """x: (N, dim_in, 1, 1) or (N, dim_in); w_fused/b_fused from fuse_params().

    tile_n=1024 is the HBM-roofline-friendly default; with dim_in ≤ 2048 f32 the
    double-buffered x/out tiles plus the resident weight slab stay well inside
    v7x's 32 MiB scoped / 64 MiB physical VMEM (vmem_limit_bytes is raised with
    headroom when the estimate approaches the scoped default).  The tile is
    also capped at ~ceil(N/2) so both v7x TensorCores receive grid blocks.
    """
    if x.ndim == 4:
        x = x.reshape(x.shape[0], -1)    # contiguous NCHW with 1x1 spatial: free
    n, dim_in = x.shape
    k_w, out_pad = w_fused.shape
    assert k_w == dim_in, "fused weight contraction dim must match dim_in"
    out_dtype = x.dtype

    # Empty-proposal guard: zero/undefined grid is illegal.
    if n == 0:
        if return_slab:
            return jnp.zeros((0, out_pad), out_dtype)
        return (jnp.zeros((0, num_classes), out_dtype),
                jnp.zeros((0, bbox_out), out_dtype))

    # Matmul runs in x's arriving dtype (no wrapper-side cast pass of x).
    if w_fused.dtype != x.dtype:
        w_fused = w_fused.astype(x.dtype)   # tiny one-off (dim_in x 128)

    itemsize = jnp.dtype(x.dtype).itemsize
    row_align = {4: 8, 2: 16, 1: 32}.get(itemsize, 8)

    # Biggest tile up to tile_n, but keep >= 2 grid blocks when N allows so the
    # "parallel" grid axis can shard across both v7x TensorCores.
    tile = min(_round_up(tile_n, row_align),
               _round_up(pl.cdiv(n, 2), row_align))
    tile = max(tile, row_align)
    grid = (pl.cdiv(n, tile),)            # partial last block: no N-pad copy

    cost = pl.CostEstimate(
        flops=2 * n * dim_in * out_pad,
        transcendentals=n * num_classes,
        bytes_accessed=(n * dim_in + dim_in * out_pad) * itemsize
        + out_pad * 4
        + n * out_pad * jnp.dtype(out_dtype).itemsize,
    )

    # VMEM footprint: double-buffered x + out tiles, double-buffered (but
    # constant-indexed) weight slab, biases.  Raise the scoped limit only if
    # we approach the 32 MiB default; cap at 64 MiB (v7x physical).
    vmem_est = (2 * tile * dim_in * itemsize
                + 2 * tile * out_pad * jnp.dtype(out_dtype).itemsize
                + 2 * dim_in * out_pad * itemsize
                + 2 * out_pad * 4)
    compiler_kwargs = dict(dimension_semantics=("parallel",))
    if vmem_est > 24 * 1024 * 1024:
        compiler_kwargs["vmem_limit_bytes"] = min(
            int(vmem_est * 3 // 2), 64 * 1024 * 1024)

    out = pl.pallas_call(
        _make_kernel(num_classes, bbox_out),
        out_shape=jax.ShapeDtypeStruct((n, out_pad), out_dtype),
        grid_spec=pltpu.PrefetchScalarGridSpec(
            num_scalar_prefetch=0,
            grid=grid,
            in_specs=[
                pl.BlockSpec((tile, dim_in), lambda i: (i, 0)),
                pl.BlockSpec((dim_in, out_pad), lambda i: (0, 0)),  # VMEM-resident
                pl.BlockSpec((1, out_pad), lambda i: (0, 0)),       # VMEM-resident
            ],
            out_specs=pl.BlockSpec((tile, out_pad), lambda i: (i, 0)),
        ),
        compiler_params=pltpu.CompilerParams(**compiler_kwargs),
        cost_estimate=cost,
    )(x, w_fused, b_fused)

    if return_slab:
        # Lane-dense (N, 128) slab: cls probs in [:num_classes], bbox preds in
        # [num_classes:num_classes+bbox_out].  Avoids the slab->slice HBM pass.
        return out

    cls_score = out[:, :num_classes]
    bbox_pred = out[:, num_classes:num_classes + bbox_out]
    return cls_score, bbox_pred


def init_params(key, dim_in, num_classes, bbox_out):
    """Deterministic init matching _init_weights: normal(std) weights, zero biases."""
    k1, k2 = jax.random.split(key)
    w_cls = 0.01 * jax.random.normal(k1, (num_classes, dim_in), dtype=jnp.float32)
    b_cls = jnp.zeros((num_classes,), dtype=jnp.float32)
    w_bbox = 0.001 * jax.random.normal(k2, (bbox_out, dim_in), dtype=jnp.float32)
    b_bbox = jnp.zeros((bbox_out,), dtype=jnp.float32)
    return w_cls, b_cls, w_bbox, b_bbox


if __name__ == "__main__":
    # Config (synthetic, deterministic — stands in for cfg.MODEL.*)
    NUM_CLASSES = 8
    CLS_AGNOSTIC_BBOX_REG = False
    DIM_IN = 32
    BBOX_OUT = 4 * 2 if CLS_AGNOSTIC_BBOX_REG else 4 * NUM_CLASSES
    N = 8  # number of RoIs

    key = jax.random.PRNGKey(0)
    kx, kp = jax.random.split(key)

    # Input in NCHW with 1x1 spatial, as produced by the RoI head.
    x = jax.random.normal(kx, (N, DIM_IN, 1, 1), dtype=jnp.float32)
    w_cls, b_cls, w_bbox, b_bbox = init_params(kp, DIM_IN, NUM_CLASSES, BBOX_OUT)

    # One-time param fusion / lane padding (lives in module init in practice).
    w_fused, b_fused = fuse_params(w_cls, b_cls, w_bbox, b_bbox)

    fwd = jax.jit(functools.partial(
        fast_rcnn_outputs_forward, num_classes=NUM_CLASSES, bbox_out=BBOX_OUT))
    cls_score, bbox_pred = fwd(x, w_fused, b_fused)
    jax.block_until_ready((cls_score, bbox_pred))

    # Pure-JAX reference (PyTorch eval-mode forward).
    x2 = x.reshape(N, DIM_IN)
    ref_cls = jax.nn.softmax(x2 @ w_cls.T + b_cls, axis=1)
    ref_bbox = x2 @ w_bbox.T + b_bbox

    assert cls_score.shape == (N, NUM_CLASSES)
    assert bbox_pred.shape == (N, BBOX_OUT)
    assert jnp.allclose(cls_score, ref_cls, atol=1e-4, rtol=1e-4)
    assert jnp.allclose(bbox_pred, ref_bbox, atol=1e-4, rtol=1e-4)

    print("KERNEL_OK")
</pallas_src>

<mosaic_0001>
module attributes {stable_mosaic.version = 11 : i64} {
  func.func @kernel(%arg0: i32, %arg1: memref<8x32xf32, #tpu.memory_space<vmem>>, %arg2: memref<32x128xf32, #tpu.memory_space<vmem>>, %arg3: memref<1x128xf32, #tpu.memory_space<vmem>>, %arg4: memref<8x128xf32, #tpu.memory_space<vmem>>) attributes {dimension_semantics = [#tpu.dimension_semantics<parallel>], iteration_bounds = array<i64: 1>, scalar_prefetch = 0 : i64, scratch_operands = 0 : i64, tpu.core_type = #tpu.core_type<tc>, window_params = [{transform_indices = @transform_0, window_bounds = array<i64: 8, 32>}, {pipeline_mode = #tpu.pipeline_mode<synchronous>, transform_indices = @transform_1, window_bounds = array<i64: 32, 128>}, {pipeline_mode = #tpu.pipeline_mode<synchronous>, transform_indices = @transform_2, window_bounds = array<i64: 1, 128>}, {transform_indices = @transform_3, window_bounds = array<i64: 8, 128>}]} {
    %c0 = arith.constant 0 : index
    %c0_0 = arith.constant 0 : index
    %0 = vector.load %arg1[%c0, %c0_0] : memref<8x32xf32, #tpu.memory_space<vmem>>, vector<8x32xf32>
    %c0_1 = arith.constant 0 : index
    %c0_2 = arith.constant 0 : index
    %1 = vector.load %arg2[%c0_1, %c0_2] : memref<32x128xf32, #tpu.memory_space<vmem>>, vector<32x128xf32>
    %cst = arith.constant dense<0.000000e+00> : vector<8x128xf32>
    %2 = tpu.matmul %0, %1, %cst {dimension_numbers = #tpu.dot_dimension_numbers<[1], [0], [0], [1], [0, 0, 1, 1], [], []>} : vector<8x32xf32>, vector<32x128xf32>, vector<8x128xf32> -> vector<8x128xf32>
    %c0_3 = arith.constant 0 : index
    %c0_4 = arith.constant 0 : index
    %3 = vector.load %arg3[%c0_3, %c0_4] : memref<1x128xf32, #tpu.memory_space<vmem>>, vector<1x128xf32>
    %4 = vector.broadcast %3 : vector<1x128xf32> to vector<8x128xf32>
    %5 = arith.addf %2, %4 : vector<8x128xf32>
    %6 = tpu.iota {dimensions = array<i32: 1>} : vector<8x128xi32>
    %c8_i32 = arith.constant 8 : i32
    %7 = vector.broadcast %c8_i32 : i32 to vector<8x128xi32>
    %8 = arith.cmpi slt, %6, %7 : vector<8x128xi32>
    %c8_i32_5 = arith.constant 8 : i32
    %9 = vector.broadcast %c8_i32_5 : i32 to vector<8x128xi32>
    %10 = arith.cmpi sge, %6, %9 : vector<8x128xi32>
    %c40_i32 = arith.constant 40 : i32
    %11 = vector.broadcast %c40_i32 : i32 to vector<8x128xi32>
    %12 = arith.cmpi slt, %6, %11 : vector<8x128xi32>
    %13 = arith.andi %10, %12 : vector<8x128xi1>
    %cst_6 = arith.constant 0xFF800000 : f32
    %14 = vector.broadcast %cst_6 : f32 to vector<8x128xf32>
    %15 = arith.select %8, %5, %14 : vector<8x128xi1>, vector<8x128xf32>
    %cst_7 = arith.constant dense<0xFF800000> : vector<8xf32>
    %16 = vector.multi_reduction <maximumf>, %15, %cst_7 [1] : vector<8x128xf32> to vector<8xf32>
    %17 = vector.shape_cast %16 : vector<8xf32> to vector<8x1xf32>
    %18 = vector.broadcast %17 : vector<8x1xf32> to vector<8x128xf32>
    %19 = arith.subf %15, %18 : vector<8x128xf32>
    %20 = math.exp %19 : vector<8x128xf32>
    %cst_8 = arith.constant dense<0.000000e+00> : vector<8xf32>
    %21 = vector.multi_reduction <add>, %20, %cst_8 [1] : vector<8x128xf32> to vector<8xf32>
    %22 = vector.shape_cast %21 : vector<8xf32> to vector<8x1xf32>
    %23 = tpu.reciprocal %22 : vector<8x1xf32> -> vector<8x1xf32>
    %24 = vector.broadcast %23 : vector<8x1xf32> to vector<8x128xf32>
    %25 = arith.mulf %20, %24 : vector<8x128xf32>
    %cst_9 = arith.constant 0.000000e+00 : f32
    %26 = vector.broadcast %cst_9 : f32 to vector<8x128xf32>
    %27 = arith.select %13, %5, %26 : vector<8x128xi1>, vector<8x128xf32>
    %28 = arith.addf %25, %27 : vector<8x128xf32>
    %c0_10 = arith.constant 0 : index
    %c0_11 = arith.constant 0 : index
    %29 = vector.load %arg4[%c0_10, %c0_11] : memref<8x128xf32, #tpu.memory_space<vmem>>, vector<8x128xf32>
    tpu.vector_store %arg4[%c0_10, %c0_11], %28 {strides = array<i32>} : memref<8x128xf32, #tpu.memory_space<vmem>>, vector<8x128xf32>,
    return
  }
  func.func @transform_0(%arg0: i32) -> (i32, i32) {
    %c0_i32 = arith.constant 0 : i32
    %c0_i32_0 = arith.constant 0 : i32
    return %arg0, %c0_i32 : i32, i32
  }
  func.func @transform_1(%arg0: i32) -> (i32, i32) {
    %c0_i32 = arith.constant 0 : i32
    %c0_i32_0 = arith.constant 0 : i32
    %c0_i32_1 = arith.constant 0 : i32
    return %c0_i32, %c0_i32_0 : i32, i32
  }
  func.func @transform_2(%arg0: i32) -> (i32, i32) {
    %c0_i32 = arith.constant 0 : i32
    %c0_i32_0 = arith.constant 0 : i32
    %c0_i32_1 = arith.constant 0 : i32
    return %c0_i32, %c0_i32_0 : i32, i32
  }
  func.func @transform_3(%arg0: i32) -> (i32, i32) {
    %c0_i32 = arith.constant 0 : i32
    %c0_i32_0 = arith.constant 0 : i32
    return %arg0, %c0_i32 : i32, i32
  }
}

</mosaic_0001>

<llo_original>
// kernel: fast_rcnn_outputs_forward.1
$region0: #{fast_rcnn_outputs_forward.1}
  #allocation0 [shape = 'u32[]', space=smem, size = 0x4, offset = 0x4, fixed_abs, tag = 'smem constant byte address 0x4 - core index']
  #allocation1 [shape = 'u32[144,128]{1,0:T(1,128)}', space=vmem, size = 0x12000, scoped, tag = 'internal scratch']
  %s0 = inlined_call_operand.hbm [shape: f32[8,32], index: 0, kind: input, shape index: {}]
  %s1 = inlined_call_operand.hbm [shape: f32[32,128], index: 1, kind: input, shape index: {}]
  %s2 = inlined_call_operand.vmem [shape: f32[1,128], index: 2, kind: input, shape index: {}]
  %s3 = inlined_call_operand.vmem [shape: f32[8,128], index: 3, kind: output, shape index: {}]
  %s4 = sld [smem:[#allocation0]]
  $region30: #{fast_rcnn_outputs_forward.1} parent=0
    _
  %s6 = ssub.s32 1, %s4
  %s7 = scalar_select 0, %s6, %s4
  $region1: #{fast_rcnn_outputs_forward.1} parent=0
    #allocation2 [shape = 'u8[4096]{0}', space=vmem, size = 0x1000, scoped, tag = 'input window, operand 0, single buffered']
    #allocation3 [shape = 's32[1]{0}', space=sflag, size = 0x4, scoped, tag = 'scoped memory for fast_rcnn_outputs_forward.1']
    #allocation4 [shape = 'u8[16384]{0}', space=vmem, size = 0x4000, scoped, tag = 'input window, operand 1, single buffered']
    #allocation5 [shape = 's32[1]{0}', space=sflag, size = 0x4, scoped, tag = 'scoped memory for fast_rcnn_outputs_forward.1']
    %8 = vsyncpa [#allocation3], 0
    %9 = vsyncpa [#allocation5], 0
    // Predicated region
    $region2: #{fast_rcnn_outputs_forward.1} parent=1 // pred_check
      _
    $region3: #{fast_rcnn_outputs_forward.1} parent=1 // pred_check_branch
      %11 = sbr.rel (0) target = $region5
    $region4: #{fast_rcnn_outputs_forward.1} parent=1 // pred_region
      %s13 = ssub.s32 128, 128
      %14 = vsyncadd [#allocation3], %s13
      %s16 = sshll.u32 [#allocation2], 4
      %s17 = int_to_ptr.vmem [resolvable:$true] %s16
      %19 = dma.hbm_to_vmem [thread:$0]  %s0, 128, %s17, [#allocation3]
    $region5: #{fast_rcnn_outputs_forward.1} parent=1 // pred_fallthru
      _
    // Predicated region
    $region6: #{fast_rcnn_outputs_forward.1} parent=1 // pred_check
      _
    $region7: #{fast_rcnn_outputs_forward.1} parent=1 // pred_check_branch
      %21 = sbr.rel (0) target = $region9
    $region8: #{fast_rcnn_outputs_forward.1} parent=1 // pred_region
      %s23 = ssub.s32 512, 512
      %24 = vsyncadd [#allocation5], %s23
      %s25 = sshll.u32 [#allocation4], 4
      %s26 = int_to_ptr.vmem [resolvable:$true] %s25
      %31 = dma.hbm_to_vmem [thread:$0]  %s1, 512, %s26, [#allocation5], 128, 128, 8
    $region9: #{fast_rcnn_outputs_forward.1} parent=1 // pred_fallthru
      _
    // Predicated region
    $region10: #{fast_rcnn_outputs_forward.1} parent=1 // pred_check
      _
    $region11: #{fast_rcnn_outputs_forward.1} parent=1 // pred_check_branch
      %33 = sbr.rel (0) target = $region13
    $region12: #{fast_rcnn_outputs_forward.1} parent=1 // pred_region
      _
    $region13: #{fast_rcnn_outputs_forward.1} parent=1 // pred_fallthru
      _
    // Predicated region
    $region14: #{fast_rcnn_outputs_forward.1} parent=1 // pred_check
      _
    $region15: #{fast_rcnn_outputs_forward.1} parent=1 // pred_check_branch
      %35 = sbr.rel (0) target = $region17
    $region16: #{fast_rcnn_outputs_forward.1} parent=1 // pred_region
      %36 = dma.done [#allocation3], 128
    $region17: #{fast_rcnn_outputs_forward.1} parent=1 // pred_fallthru
      _
    // Predicated region
    $region18: #{fast_rcnn_outputs_forward.1} parent=1 // pred_check
      _
    $region19: #{fast_rcnn_outputs_forward.1} parent=1 // pred_check_branch
      %38 = sbr.rel (0) target = $region21
    $region20: #{fast_rcnn_outputs_forward.1} parent=1 // pred_region
      %39 = dma.done [#allocation5], 512
    $region21: #{fast_rcnn_outputs_forward.1} parent=1 // pred_fallthru
      _
    %v40 = vld [vmem:[#allocation2] sm:$0xff]
    %v41 = vld [vmem:[#allocation4] sm:$0xff]
    %v42 = vld [vmem:[#allocation4 + $0x8] sm:$0xff]
    %v43 = vld [vmem:[#allocation4 + $0x10] sm:$0xff]
    %v44 = vld [vmem:[#allocation4 + $0x18] sm:$0xff]
    %v45 = vld [vmem:[%s2] sm:$0x1]
    %v47 = vlaneseq
    %v48 = vshrl.u32 %v47, 7
    %v49 = vsub.s32 0, %v48
    %v50 = vrot.slane %v45, %v49
    %vm52 = vcmask 261120
    %v54 = vsel %vm52, %v40, 0
    %56 = vmatprep.subr.mxu0 0.0
    %57 = vmatpush1.msra.mxu0 0.0
    %58 = vmatprep.subr.mxu0 0.0
    %59 = vmatpush1.msra.mxu0 0.0
    %60 = vmatprep.subr.mxu0 0.0
    %61 = vmatpush1.msra.mxu0 0.0
    %62 = vmatprep.subr.mxu0 0.0
    %63 = vmatpush1.msra.mxu0 0.0
    %64 = vmatprep.subr.mxu0 0.0
    %65 = vmatpush1.msra.mxu0 0.0
    %66 = vmatprep.subr.mxu0 0.0
    %67 = vmatpush1.msra.mxu0 0.0
    %68 = vmatprep.subr.mxu0 0.0
    %69 = vmatpush1.msra.mxu0 0.0
    %70 = vmatprep.subr.mxu0 0.0
    %71 = vmatpush1.msra.mxu0 0.0
    %72 = vmatprep.subr.mxu0 0.0
    %73 = vmatpush1.msra.mxu0 0.0
    %74 = vmatprep.subr.mxu0 0.0
    %75 = vmatpush1.msra.mxu0 0.0
    %76 = vmatprep.subr.mxu0 0.0
    %77 = vmatpush1.msra.mxu0 0.0
    %78 = vmatprep.subr.mxu0 0.0
    %79 = vmatpush1.msra.mxu0 0.0
    %80 = vmatprep.subr.mxu0 0.0
    %81 = vmatpush1.msra.mxu0 %v44
    %82 = vmatprep.subr.mxu0 0.0
    %83 = vmatpush1.msra.mxu0 %v43
    %84 = vmatprep.subr.mxu0 0.0
    %85 = vmatpush1.msra.mxu0 %v42
    %86 = vmatprep.subr.mxu0 0.0
    %87 = vmatpush1.msra.mxu0 %v41
    %88 = vmatprep.subr.mxu0 0.0
    %89 = vmatpush2.msra.mxu0 0.0
    %90 = vmatprep.subr.mxu0 0.0
    %91 = vmatpush2.msra.mxu0 0.0
    %92 = vmatprep.subr.mxu0 0.0
    %93 = vmatpush2.msra.mxu0 0.0
    %94 = vmatprep.subr.mxu0 0.0
    %95 = vmatpush2.msra.mxu0 0.0
    %96 = vmatprep.subr.mxu0 0.0
    %97 = vmatpush2.msra.mxu0 0.0
    %98 = vmatprep.subr.mxu0 0.0
    %99 = vmatpush2.msra.mxu0 0.0
    %100 = vmatprep.subr.mxu0 0.0
    %101 = vmatpush2.msra.mxu0 0.0
    %102 = vmatprep.subr.mxu0 0.0
    %103 = vmatpush2.msra.mxu0 0.0
    %104 = vmatprep.subr.mxu0 0.0
    %105 = vmatpush2.msra.mxu0 0.0
    %106 = vmatprep.subr.mxu0 0.0
    %107 = vmatpush2.msra.mxu0 0.0
    %108 = vmatprep.subr.mxu0 0.0
    %109 = vmatpush2.msra.mxu0 0.0
    %110 = vmatprep.subr.mxu0 0.0
    %111 = vmatpush2.msra.mxu0 0.0
    %112 = vmatprep.subr.mxu0 0.0
    %113 = vmatpush2.msra.mxu0 0.0
    %114 = vmatprep.subr.mxu0 0.0
    %115 = vmatpush2.msra.mxu0 0.0
    %116 = vmatprep.subr.mxu0 0.0
    %117 = vmatpush2.msra.mxu0 0.0
    %118 = vmatprep.subr.mxu0 0.0
    %119 = vmatpush2.msra.mxu0 0.0
    %120 = vmatprep.mubr.f32.mxu0 0.0
    %121 = vmatmul.mubr.f32.gmra.mxu0 %v54
    %v122 = vpop.f32.mrf.mxu0
    %v123 = vadd.f32 %v50, %v122
    %v124 = vpop.f32.mrf.mxu0
    %125 = vdwg.mxu0
    %v126 = vlaneseq
    %v127 = vand.u32 %v126, 127
    %vm128 = vcmp.lt.s32.totalorder %v127, 8
    %vm129 = vcmp.ge.s32.totalorder %v127, 8
    %vm130 = vcmp.lt.s32.totalorder %v127, 40
    %vm131 = vmand %vm129, %vm130
    %v132 = vsel %vm128, %v123, -inf
    %133 = vmax.xlane.f32.xlu0 %v132
    %v134 = vpop.xlane.xlu0 %133
    %v135 = vsub.f32 %v132, %v134
    %v136 = vmul.f32 %v135, 1.442695
    %v137 = vpow.pop %v136
    %138 = vadd.xlane.f32.xlu0 %v137
    %v139 = vpop.xlane.xlu0 %138
    %v140 = vrcp.pop %v139
    %v141 = vmul.f32 %v137, %v140
    %v142 = vsel %vm131, %v123, 0.0
    %v143 = vadd.f32 %v141, %v142
    %144 = vst [vmem:[%s3] sm:$0xff] %v143
    // Predicated region
    $region22: #{fast_rcnn_outputs_forward.1} parent=1 // pred_check
      _
    $region23: #{fast_rcnn_outputs_forward.1} parent=1 // pred_check_branch
      %146 = sbr.rel (0) target = $region25
    $region24: #{fast_rcnn_outputs_forward.1} parent=1 // pred_region
      _
    $region25: #{fast_rcnn_outputs_forward.1} parent=1 // pred_fallthru
      _
    // Predicated region
    $region26: #{fast_rcnn_outputs_forward.1} parent=1 // pred_check
      _
    $region27: #{fast_rcnn_outputs_forward.1} parent=1 // pred_check_branch
      %148 = sbr.rel (0) target = $region29
    $region28: #{fast_rcnn_outputs_forward.1} parent=1 // pred_region
      _
    $region29: #{fast_rcnn_outputs_forward.1} parent=1 // pred_fallthru
      _
    %149 = vsyncpa [#allocation3], 1
    %150 = vsyncpa [#allocation5], 1

</llo_original>
